<compile_context>
chip_gen: v6e
topology: v6e:2x2x1
jax: 0.10.0
libtpu: 0.0.40
codegen_flags: <defaults>
</compile_context>

<pallas_src>
import functools

import jax
import jax.numpy as jnp
from jax.experimental import pallas as pl
from jax.experimental.pallas import tpu as pltpu


def _round_up(x, m):
    return (x + m - 1) // m * m


def _round_down(x, m):
    return max(m, (x // m) * m)


# --------------------------------------------------------------------------- #
# Kernel
# --------------------------------------------------------------------------- #
def _ffn_kernel(x_ref, w1_ref, b1_ref, w2_ref, b2_ref, gamma_ref, beta_ref,
                o_ref, acc_ref, *, leakiness: float, eps: float):
    j = pl.program_id(1)                      # hidden-dim (reduction) axis

    # linear1 chunk (native-dtype operands -> bf16 MXU path when inputs are bf16,
    # f32 accumulation) + LeakyReLU on the hidden chunk.
    x = x_ref[...]                                                     # (tm, d_in)
    h = jnp.dot(x, w1_ref[...], preferred_element_type=jnp.float32)    # (tm, tk_h)
    h = h + b1_ref[...].astype(jnp.float32)
    if leakiness == 0.0:
        h = jnp.maximum(h, 0.0)
    else:
        h = jnp.where(h >= 0, h, leakiness * h)

    # linear2 chunk, accumulated over the hidden-dim grid axis.
    partial_out = jnp.dot(h.astype(w2_ref.dtype), w2_ref[...],
                          preferred_element_type=jnp.float32)          # (tm, d_out)

    @pl.when(j == 0)
    def _():
        acc_ref[...] = partial_out            # skip zero-init + RMW on step 0

    @pl.when(j > 0)
    def _():
        acc_ref[...] += partial_out

    @pl.when(j == pl.num_programs(1) - 1)
    def _():
        # TODO(synk): nn.Dropout is only active in training; inference (identity) here.
        out = acc_ref[...] + b2_ref[...].astype(jnp.float32) + x.astype(jnp.float32)

        # LayerNorm over the feature dim (two-pass / centered variance; the
        # epilogue runs once per row tile so this is cheap).
        mean = jnp.mean(out, axis=-1, keepdims=True)
        centered = out - mean
        var = jnp.mean(centered * centered, axis=-1, keepdims=True)
        normed = centered * jax.lax.rsqrt(var + eps)
        o_ref[...] = (normed * gamma_ref[...].astype(jnp.float32)
                      + beta_ref[...].astype(jnp.float32)).astype(o_ref.dtype)


# --------------------------------------------------------------------------- #
# Tile selection helpers (VMEM-budget aware)
# --------------------------------------------------------------------------- #
def _vmem_capacity_bytes():
    """Per-generation physical VMEM (v5e/v6e 128 MiB, v7x 64 MiB)."""
    try:
        info = pltpu.get_tpu_info()
        cap = getattr(info, "vmem_capacity_bytes", None)
        if cap:
            return int(cap)
    except Exception:
        pass
    return 64 << 20  # conservative (v7x) fallback


def _pick_hidden_tile(d_hidden, desired):
    """Largest hidden tile that is either the full hidden dim or a 128-multiple divisor."""
    if desired is None:
        desired = 2048
    if d_hidden <= desired:
        return d_hidden
    t = (desired // 128) * 128
    while t >= 128:
        if d_hidden % t == 0:
            return t
        t -= 128
    # No clean 128-multiple divisor: keep the full hidden dim; the VMEM-aware
    # row-tile selection below shrinks tm instead of silently blowing VMEM.
    return d_hidden


def _select_tiles(d_in, d_hidden, d_out, x_bytes, w_bytes, out_bytes,
                  budget, tk_target):
    """Pick the hidden tile and the largest row tile the VMEM budget allows."""
    cands = [_pick_hidden_tile(d_hidden, tk_target)]
    for t in (1024, 512, 256, 128):
        c = _pick_hidden_tile(d_hidden, t)
        if c not in cands:
            cands.append(c)

    per_row = 2 * d_in * x_bytes + 2 * d_out * out_bytes + d_out * 4  # x + out tiles + acc
    chosen_tk, chosen_tm_cap = cands[-1], 8
    for tk in cands:
        fixed = (2 * d_in * tk * w_bytes + 2 * tk * d_out * w_bytes   # W1/W2 chunks (2-buffered)
                 + 2 * tk * 4 + 6 * d_out * 4)                        # biases / gamma / beta
        if budget <= fixed:
            continue
        tm_cap = _round_down((budget - fixed) // per_row, 8)
        if tm_cap >= 128 or tk == cands[-1]:
            chosen_tk, chosen_tm_cap = tk, max(8, tm_cap)
            break
        chosen_tk, chosen_tm_cap = tk, max(8, tm_cap)
    return chosen_tk, chosen_tm_cap


def _choose_row_tile(n_rows, tm_target, tm_cap):
    n8 = _round_up(n_rows, 8)
    tm = _round_down(min(tm_target, tm_cap, n8), 8)
    # Guarantee >= 2 row tiles when there are enough rows, so the "parallel"
    # row axis can shard across the two TensorCores on v7x.
    if n8 >= 16:
        tm = min(tm, _round_down(n8 // 2, 8))
    tm = max(8, tm)
    # Prefer a tm that divides the 8-rounded row count (avoid a full-array pad),
    # but don't shrink below half the budgeted tile for it.
    t = tm
    while t >= max(8, tm // 2):
        if n8 % t == 0:
            return t, n8
        t -= 8
    return tm, n8


# --------------------------------------------------------------------------- #
# Wrapper
# --------------------------------------------------------------------------- #
def position_wise_ffn(x, w1, b1, w2, b2, gamma, beta,
                      *, leakiness=0.0, eps=1e-5,
                      tile_rows=1024, tile_hidden=2048,
                      matmul_dtype=None):
    """x: (..., D_in); returns same shape. Residual requires D_in == D_out.

    matmul_dtype: optionally cast x / W1 / W2 (e.g. to jnp.bfloat16) for the MXU;
    accumulation, residual and LayerNorm stay in f32; output keeps x's dtype.
    """
    orig_shape = x.shape
    d_in = orig_shape[-1]
    d_hidden = w1.shape[1]
    d_out = w2.shape[1]
    assert d_in == d_out, "residual add requires num_input == num_output"
    assert d_hidden % 128 == 0 or d_hidden <= 2048, (
        "d_hidden should be a multiple of 128 (or small) for clean hidden tiling")

    out_dtype = x.dtype
    x2 = x.reshape(-1, d_in)
    n_rows = x2.shape[0]

    if matmul_dtype is not None:
        x2 = x2.astype(matmul_dtype)
        w1 = w1.astype(matmul_dtype)
        w2 = w2.astype(matmul_dtype)

    x_bytes = jnp.dtype(x2.dtype).itemsize
    w_bytes = jnp.dtype(w1.dtype).itemsize
    o_bytes = jnp.dtype(out_dtype).itemsize

    # --- per-generation VMEM budget (leave ~8 MiB headroom for the compiler) ----
    budget = max(_vmem_capacity_bytes() - (8 << 20), 16 << 20)

    # --- joint hidden / row tile selection against the budget -------------------
    tk_h, tm_cap = _select_tiles(d_in, d_hidden, d_out, x_bytes, w_bytes, o_bytes,
                                 budget, tile_hidden)
    tm, n8 = _choose_row_tile(n_rows, tile_rows if tile_rows else 1024, tm_cap)
    n_hidden_steps = d_hidden // tk_h

    n_pad = _round_up(n_rows, tm)
    if n_pad != n_rows:
        # Only hit when no divisor tile was found / ragged rows; usually a no-op.
        x2 = jnp.pad(x2, ((0, n_pad - n_rows), (0, 0)))

    # Biases / norm params kept 2-D for TPU-friendly layouts.
    b1_2d = b1.reshape(1, d_hidden)
    b2_2d = b2.reshape(1, d_out)
    gamma_2d = gamma.reshape(1, d_out)
    beta_2d = beta.reshape(1, d_out)

    n_row_tiles = n_pad // tm
    flops = 2 * n_pad * (d_in * d_hidden + d_hidden * d_out)
    bytes_accessed = (n_pad * d_in * x_bytes + n_pad * d_out * o_bytes
                      + n_row_tiles * (d_in * d_hidden + d_hidden * d_out) * w_bytes)
    cost = pl.CostEstimate(flops=int(flops), transcendentals=int(n_pad),
                           bytes_accessed=int(bytes_accessed))

    kernel = functools.partial(_ffn_kernel, leakiness=float(leakiness), eps=float(eps))

    out = pl.pallas_call(
        kernel,
        out_shape=jax.ShapeDtypeStruct((n_pad, d_out), out_dtype),
        grid_spec=pltpu.PrefetchScalarGridSpec(
            num_scalar_prefetch=0,
            grid=(n_row_tiles, n_hidden_steps),
            in_specs=[
                pl.BlockSpec((tm, d_in), lambda i, j: (i, 0)),       # x tile (resident over j)
                pl.BlockSpec((d_in, tk_h), lambda i, j: (0, j)),     # W1 hidden-chunk
                pl.BlockSpec((1, tk_h), lambda i, j: (0, j)),        # b1 hidden-chunk
                pl.BlockSpec((tk_h, d_out), lambda i, j: (j, 0)),    # W2 hidden-chunk
                pl.BlockSpec((1, d_out), lambda i, j: (0, 0)),       # b2
                pl.BlockSpec((1, d_out), lambda i, j: (0, 0)),       # gamma
                pl.BlockSpec((1, d_out), lambda i, j: (0, 0)),       # beta
            ],
            out_specs=pl.BlockSpec((tm, d_out), lambda i, j: (i, 0)),
            scratch_shapes=[pltpu.VMEM((tm, d_out), jnp.float32)],
        ),
        compiler_params=pltpu.CompilerParams(
            dimension_semantics=("parallel", "arbitrary"),
            vmem_limit_bytes=int(budget),
        ),
        cost_estimate=cost,
    )(x2, w1, b1_2d, w2, b2_2d, gamma_2d, beta_2d)

    if n_pad != n_rows:
        out = out[:n_rows]
    return out.reshape(orig_shape)


# --------------------------------------------------------------------------- #
# Demo / correctness check
# --------------------------------------------------------------------------- #
if __name__ == "__main__":
    # Small but lane-dense demo shapes: batch=2, seq=64, features=128, hidden=256.
    batch, seq = 2, 64
    num_input = num_output = 128
    num_hidden = 256
    leakiness = 0.0   # module default (nn.LeakyReLU(negative_slope=leakiness))
    eps = 1e-5

    key = jax.random.PRNGKey(0)
    k_x, k_w1, k_b1, k_w2, k_b2 = jax.random.split(key, 5)

    x = jax.random.normal(k_x, (batch, seq, num_input), dtype=jnp.float32)

    # Deterministic synthetic parameters (stored as (in, out) for x @ W).
    w1 = jax.random.normal(k_w1, (num_input, num_hidden), dtype=jnp.float32) * 0.05
    b1 = jax.random.normal(k_b1, (num_hidden,), dtype=jnp.float32) * 0.01
    w2 = jax.random.normal(k_w2, (num_hidden, num_output), dtype=jnp.float32) * 0.05
    b2 = jax.random.normal(k_b2, (num_output,), dtype=jnp.float32) * 0.01
    gamma = jnp.ones((num_output,), dtype=jnp.float32)   # LayerNorm weight
    beta = jnp.zeros((num_output,), dtype=jnp.float32)   # LayerNorm bias

    # Pure-JAX reference.
    def ref(x):
        h = x @ w1 + b1
        h = jnp.where(h >= 0, h, leakiness * h)
        o = h @ w2 + b2
        o = o + x
        mu = o.mean(-1, keepdims=True)
        var = ((o - mu) ** 2).mean(-1, keepdims=True)
        return (o - mu) / jnp.sqrt(var + eps) * gamma + beta

    expected = ref(x)

    # f32 operand path (exact semantics of the PyTorch module in eval mode).
    out = position_wise_ffn(x, w1, b1, w2, b2, gamma, beta,
                            leakiness=leakiness, eps=eps)
    out = jax.block_until_ready(out)
    assert out.shape == x.shape
    assert jnp.allclose(out, expected, atol=1e-3, rtol=1e-3)

    # bf16 MXU-operand path (f32 accumulation / LayerNorm) — perf path on v6e/v7x.
    out_bf16 = position_wise_ffn(x, w1, b1, w2, b2, gamma, beta,
                                 leakiness=leakiness, eps=eps,
                                 matmul_dtype=jnp.bfloat16)
    out_bf16 = jax.block_until_ready(out_bf16)
    assert jnp.allclose(out_bf16, expected, atol=5e-2, rtol=5e-2)

    print("KERNEL_OK")
</pallas_src>

<mosaic_0001>
module attributes {stable_mosaic.version = 11 : i64} {
  func.func @_ffn_kernel(%arg0: i32, %arg1: i32, %arg2: memref<64x128xf32, #tpu.memory_space<vmem>>, %arg3: memref<128x256xf32, #tpu.memory_space<vmem>>, %arg4: memref<1x256xf32, #tpu.memory_space<vmem>>, %arg5: memref<256x128xf32, #tpu.memory_space<vmem>>, %arg6: memref<1x128xf32, #tpu.memory_space<vmem>>, %arg7: memref<1x128xf32, #tpu.memory_space<vmem>>, %arg8: memref<1x128xf32, #tpu.memory_space<vmem>>, %arg9: memref<64x128xf32, #tpu.memory_space<vmem>>, %arg10: memref<64x128xf32, #tpu.memory_space<vmem>>) attributes {dimension_semantics = [#tpu.dimension_semantics<parallel>, #tpu.dimension_semantics<arbitrary>], iteration_bounds = array<i64: 2, 1>, scalar_prefetch = 0 : i64, scratch_operands = 1 : i64, tpu.core_type = #tpu.core_type<tc>, window_params = [{transform_indices = @transform_0, window_bounds = array<i64: 64, 128>}, {transform_indices = @transform_1, window_bounds = array<i64: 128, 256>}, {transform_indices = @transform_2, window_bounds = array<i64: 1, 256>}, {transform_indices = @transform_3, window_bounds = array<i64: 256, 128>}, {pipeline_mode = #tpu.pipeline_mode<synchronous>, transform_indices = @transform_4, window_bounds = array<i64: 1, 128>}, {pipeline_mode = #tpu.pipeline_mode<synchronous>, transform_indices = @transform_5, window_bounds = array<i64: 1, 128>}, {pipeline_mode = #tpu.pipeline_mode<synchronous>, transform_indices = @transform_6, window_bounds = array<i64: 1, 128>}, {transform_indices = @transform_7, window_bounds = array<i64: 64, 128>}]} {
    %c0 = arith.constant 0 : index
    %c0_0 = arith.constant 0 : index
    %0 = vector.load %arg2[%c0, %c0_0] : memref<64x128xf32, #tpu.memory_space<vmem>>, vector<64x128xf32>
    %c0_1 = arith.constant 0 : index
    %c0_2 = arith.constant 0 : index
    %1 = vector.load %arg3[%c0_1, %c0_2] : memref<128x256xf32, #tpu.memory_space<vmem>>, vector<128x256xf32>
    %cst = arith.constant dense<0.000000e+00> : vector<64x256xf32>
    %2 = tpu.matmul %0, %1, %cst {dimension_numbers = #tpu.dot_dimension_numbers<[1], [0], [0], [1], [0, 0, 1, 1], [], []>} : vector<64x128xf32>, vector<128x256xf32>, vector<64x256xf32> -> vector<64x256xf32>
    %c0_3 = arith.constant 0 : index
    %c0_4 = arith.constant 0 : index
    %3 = vector.load %arg4[%c0_3, %c0_4] : memref<1x256xf32, #tpu.memory_space<vmem>>, vector<1x256xf32>
    %4 = vector.broadcast %3 : vector<1x256xf32> to vector<64x256xf32>
    %5 = arith.addf %2, %4 : vector<64x256xf32>
    %cst_5 = arith.constant 0.000000e+00 : f32
    %6 = vector.broadcast %cst_5 : f32 to vector<64x256xf32>
    %7 = arith.maximumf %5, %6 : vector<64x256xf32>
    %c0_6 = arith.constant 0 : index
    %c0_7 = arith.constant 0 : index
    %8 = vector.load %arg5[%c0_6, %c0_7] : memref<256x128xf32, #tpu.memory_space<vmem>>, vector<256x128xf32>
    %cst_8 = arith.constant dense<0.000000e+00> : vector<64x128xf32>
    %9 = tpu.matmul %7, %8, %cst_8 {dimension_numbers = #tpu.dot_dimension_numbers<[1], [0], [0], [1], [0, 0, 1, 1], [], []>} : vector<64x256xf32>, vector<256x128xf32>, vector<64x128xf32> -> vector<64x128xf32>
    %c0_i32 = arith.constant 0 : i32
    %10 = arith.cmpi eq, %arg1, %c0_i32 : i32
    %11 = arith.extui %10 : i1 to i32
    %c0_i32_9 = arith.constant 0 : i32
    %12 = arith.cmpi ne, %11, %c0_i32_9 : i32
    scf.if %12 {
      %c0_14 = arith.constant 0 : index
      %c0_15 = arith.constant 0 : index
      %19 = vector.load %arg10[%c0_14, %c0_15] : memref<64x128xf32, #tpu.memory_space<vmem>>, vector<64x128xf32>
      tpu.vector_store %arg10[%c0_14, %c0_15], %9 {strides = array<i32>} : memref<64x128xf32, #tpu.memory_space<vmem>>, vector<64x128xf32>,
    } else {
    }
    %c0_i32_10 = arith.constant 0 : i32
    %13 = arith.cmpi sgt, %arg1, %c0_i32_10 : i32
    %14 = arith.extui %13 : i1 to i32
    %c0_i32_11 = arith.constant 0 : i32
    %15 = arith.cmpi ne, %14, %c0_i32_11 : i32
    scf.if %15 {
      %c0_14 = arith.constant 0 : index
      %c0_15 = arith.constant 0 : index
      %19 = vector.load %arg10[%c0_14, %c0_15] : memref<64x128xf32, #tpu.memory_space<vmem>>, vector<64x128xf32>
      %20 = arith.addf %19, %9 : vector<64x128xf32>
      %c0_16 = arith.constant 0 : index
      %c0_17 = arith.constant 0 : index
      %21 = vector.load %arg10[%c0_16, %c0_17] : memref<64x128xf32, #tpu.memory_space<vmem>>, vector<64x128xf32>
      tpu.vector_store %arg10[%c0_16, %c0_17], %20 {strides = array<i32>} : memref<64x128xf32, #tpu.memory_space<vmem>>, vector<64x128xf32>,
    } else {
    }
    %c0_i32_12 = arith.constant 0 : i32
    %16 = arith.cmpi eq, %arg1, %c0_i32_12 : i32
    %17 = arith.extui %16 : i1 to i32
    %c0_i32_13 = arith.constant 0 : i32
    %18 = arith.cmpi ne, %17, %c0_i32_13 : i32
    scf.if %18 {
      %c0_14 = arith.constant 0 : index
      %c0_15 = arith.constant 0 : index
      %19 = vector.load %arg10[%c0_14, %c0_15] : memref<64x128xf32, #tpu.memory_space<vmem>>, vector<64x128xf32>
      %c0_16 = arith.constant 0 : index
      %c0_17 = arith.constant 0 : index
      %20 = vector.load %arg6[%c0_16, %c0_17] : memref<1x128xf32, #tpu.memory_space<vmem>>, vector<1x128xf32>
      %21 = vector.broadcast %20 : vector<1x128xf32> to vector<64x128xf32>
      %22 = arith.addf %19, %21 : vector<64x128xf32>
      %23 = arith.addf %22, %0 : vector<64x128xf32>
      %cst_18 = arith.constant dense<0.000000e+00> : vector<64xf32>
      %24 = vector.multi_reduction <add>, %23, %cst_18 [1] : vector<64x128xf32> to vector<64xf32>
      %25 = vector.shape_cast %24 : vector<64xf32> to vector<64x1xf32>
      %cst_19 = arith.constant 1.280000e+02 : f32
      %26 = vector.broadcast %cst_19 : f32 to vector<64x1xf32>
      %27 = arith.divf %25, %26 : vector<64x1xf32>
      %28 = vector.broadcast %27 : vector<64x1xf32> to vector<64x128xf32>
      %29 = arith.subf %23, %28 : vector<64x128xf32>
      %30 = arith.mulf %29, %29 : vector<64x128xf32>
      %cst_20 = arith.constant dense<0.000000e+00> : vector<64xf32>
      %31 = vector.multi_reduction <add>, %30, %cst_20 [1] : vector<64x128xf32> to vector<64xf32>
      %32 = vector.shape_cast %31 : vector<64xf32> to vector<64x1xf32>
      %cst_21 = arith.constant 1.280000e+02 : f32
      %33 = vector.broadcast %cst_21 : f32 to vector<64x1xf32>
      %34 = arith.divf %32, %33 : vector<64x1xf32>
      %cst_22 = arith.constant 9.99999974E-6 : f32
      %35 = vector.broadcast %cst_22 : f32 to vector<64x1xf32>
      %36 = arith.addf %34, %35 : vector<64x1xf32>
      %37 = math.rsqrt %36 : vector<64x1xf32>
      %38 = vector.broadcast %37 : vector<64x1xf32> to vector<64x128xf32>
      %39 = arith.mulf %29, %38 : vector<64x128xf32>
      %c0_23 = arith.constant 0 : index
      %c0_24 = arith.constant 0 : index
      %40 = vector.load %arg7[%c0_23, %c0_24] : memref<1x128xf32, #tpu.memory_space<vmem>>, vector<1x128xf32>
      %41 = vector.broadcast %40 : vector<1x128xf32> to vector<64x128xf32>
      %42 = arith.mulf %39, %41 : vector<64x128xf32>
      %c0_25 = arith.constant 0 : index
      %c0_26 = arith.constant 0 : index
      %43 = vector.load %arg8[%c0_25, %c0_26] : memref<1x128xf32, #tpu.memory_space<vmem>>, vector<1x128xf32>
      %44 = vector.broadcast %43 : vector<1x128xf32> to vector<64x128xf32>
      %45 = arith.addf %42, %44 : vector<64x128xf32>
      %c0_27 = arith.constant 0 : index
      %c0_28 = arith.constant 0 : index
      %46 = vector.load %arg9[%c0_27, %c0_28] : memref<64x128xf32, #tpu.memory_space<vmem>>, vector<64x128xf32>
      tpu.vector_store %arg9[%c0_27, %c0_28], %45 {strides = array<i32>} : memref<64x128xf32, #tpu.memory_space<vmem>>, vector<64x128xf32>,
    } else {
    }
    return
  }
  func.func @transform_0(%arg0: i32, %arg1: i32) -> (i32, i32) {
    %c0_i32 = arith.constant 0 : i32
    %c0_i32_0 = arith.constant 0 : i32
    return %arg0, %c0_i32 : i32, i32
  }
  func.func @transform_1(%arg0: i32, %arg1: i32) -> (i32, i32) {
    %c0_i32 = arith.constant 0 : i32
    %c0_i32_0 = arith.constant 0 : i32
    return %c0_i32, %arg1 : i32, i32
  }
  func.func @transform_2(%arg0: i32, %arg1: i32) -> (i32, i32) {
    %c0_i32 = arith.constant 0 : i32
    %c0_i32_0 = arith.constant 0 : i32
    return %c0_i32, %arg1 : i32, i32
  }
  func.func @transform_3(%arg0: i32, %arg1: i32) -> (i32, i32) {
    %c0_i32 = arith.constant 0 : i32
    %c0_i32_0 = arith.constant 0 : i32
    return %arg1, %c0_i32 : i32, i32
  }
  func.func @transform_4(%arg0: i32, %arg1: i32) -> (i32, i32) {
    %c0_i32 = arith.constant 0 : i32
    %c0_i32_0 = arith.constant 0 : i32
    %c0_i32_1 = arith.constant 0 : i32
    return %c0_i32, %c0_i32_0 : i32, i32
  }
  func.func @transform_5(%arg0: i32, %arg1: i32) -> (i32, i32) {
    %c0_i32 = arith.constant 0 : i32
    %c0_i32_0 = arith.constant 0 : i32
    %c0_i32_1 = arith.constant 0 : i32
    return %c0_i32, %c0_i32_0 : i32, i32
  }
  func.func @transform_6(%arg0: i32, %arg1: i32) -> (i32, i32) {
    %c0_i32 = arith.constant 0 : i32
    %c0_i32_0 = arith.constant 0 : i32
    %c0_i32_1 = arith.constant 0 : i32
    return %c0_i32, %c0_i32_0 : i32, i32
  }
  func.func @transform_7(%arg0: i32, %arg1: i32) -> (i32, i32) {
    %c0_i32 = arith.constant 0 : i32
    %c0_i32_0 = arith.constant 0 : i32
    return %arg0, %c0_i32 : i32, i32
  }
}

</mosaic_0001>

<llo_original>
// kernel: tpu_custom_call.1
$region0: #{tpu_custom_call.1}
  #allocation0 [shape = 'u32[]', space=smem, size = 0x4, offset = 0x4, fixed_abs, tag = 'smem constant byte address 0x4 - core index']
  #allocation1 [shape = 'u32[144,128]{1,0:T(1,128)}', space=vmem, size = 0x12000, scoped, tag = 'internal scratch']
  #allocation2 [shape = 'f32[64,128]{1,0:T(8,128)}', space=vmem, size = 0x8000, scoped, tag = 'scratch operand']
  %s0 = inlined_call_operand.hbm [shape: f32[128,128], index: 0, kind: input, shape index: {}]
  %s1 = inlined_call_operand.hbm [shape: f32[128,256], index: 1, kind: input, shape index: {}]
  %s2 = inlined_call_operand.vmem [shape: f32[1,256], index: 2, kind: input, shape index: {}]
  %s3 = inlined_call_operand.hbm [shape: f32[256,128], index: 3, kind: input, shape index: {}]
  %s4 = inlined_call_operand.vmem [shape: f32[1,128], index: 4, kind: input, shape index: {}]
  %s5 = inlined_call_operand.vmem [shape: f32[1,128], index: 5, kind: input, shape index: {}]
  %s6 = inlined_call_operand.vmem [shape: f32[1,128], index: 6, kind: input, shape index: {}]
  %s7 = inlined_call_operand.hbm [shape: f32[128,128], index: 7, kind: output, shape index: {}]
  %s8 = sld [smem:[#allocation0]]
  $region85: #{tpu_custom_call.1} parent=0
    _
  %s10 = ssub.s32 1, %s8
  %s11 = scalar_select 0, %s10, %s8
  $region1: #{tpu_custom_call.1} parent=0
    #allocation3 [shape = 'u8[65536]{0}', space=vmem, size = 0x10000, scoped, tag = 'input window, operand 0']
    #allocation4 [shape = 's32[2]{0}', space=sflag, size = 0x8, scoped, tag = 'scoped memory for tpu_custom_call.1']
    #allocation5 [shape = 's32[2]{0}', space=sflag, size = 0x8, scoped, tag = 'scoped memory for tpu_custom_call.1']
    #allocation6 [shape = 'u8[131072]{0}', space=vmem, size = 0x20000, scoped, tag = 'input window, operand 1, single buffered']
    #allocation7 [shape = 's32[1]{0}', space=sflag, size = 0x4, scoped, tag = 'scoped memory for tpu_custom_call.1']
    #allocation8 [shape = 'u8[131072]{0}', space=vmem, size = 0x20000, scoped, tag = 'input window, operand 3, single buffered']
    #allocation9 [shape = 'u8[65536]{0}', space=vmem, size = 0x10000, scoped, tag = 'output window, operand 0']
    %12 = vsyncpa [#allocation4], 0
    %s13 = scalar_lea.sflag [#allocation4], 1
    %14 = vsyncpa %s13, 0
    %15 = vsyncpa [#allocation7], 0
    %16 = vsyncpa [#allocation5], 0
    %s17 = scalar_lea.sflag [#allocation5], 1
    %18 = vsyncpa %s17, 0
    loop: start=0, step=1, limit=4
    $region2: #{tpu_custom_call.1} parent=1 // loop_pre_header
      _
    $region3: #{tpu_custom_call.1} parent=1 // loop_header
      %s20 = sphi 0, %s24
      %p21 = scmp.ge.s32.totalorder %s20, 4
      %s27 = sphi 0, %s39
      %s28 = sphi 0, %s35
      %s29 = sphi 0, %s27
      %s30 = sphi 0, %s28
      %s31 = sphi 0, %s29
      %s32 = sphi 0, %s30
      %s42 = sphi 0, %s44
      %s45 = sphi 0, %s42
      %s46 = sphi 0, %s45
      %s62 = sphi 0, %s46
      %s68 = sphi 0, %s70
      %s71 = sphi 0, %s68
      %s72 = sphi 0, %s71
      %s88 = sphi 0, %s72
      %s94 = sphi 0, %s96
      %s97 = sphi 0, %s94
      %s98 = sphi 0, %s97
      %s114 = sphi 0, %s98
      %s120 = sphi 0, %s122
      %s123 = sphi 0, %s120
      %s124 = sphi 0, %s123
      %s140 = sphi 0, %s124
      %s144 = sphi 0, %s144
      %s146 = sphi 0, %s144
      %s147 = sphi 0, %s146
      %s161 = sphi 0, %s147
      %s165 = sphi 0, %s165
      %s167 = sphi 0, %s165
      %s168 = sphi 0, %s167
      %s182 = sphi 0, %s168
      %s186 = sphi 0, %s186
      %s188 = sphi 0, %s186
      %s189 = sphi 0, %s188
      %s203 = sphi 0, %s189
      %s209 = sphi 0, %s211
      %s212 = sphi 0, %s209
      %s213 = sphi 0, %s212
      %s229 = sphi 0, %s213
    $region4: #{tpu_custom_call.1} parent=1 // loop_header_branch
      %23 = sbr.rel (%p21) target = $region8
    $region5: #{tpu_custom_call.1} parent=1 // loop_body
      %s25 = ssub.s32 %s20, 1
      %s26 = ssub.s32 %s20, 2
      %s33 = sadd.s32 1, %s28
      %p34 = scmp.ge.s32.totalorder %s33, 1
      %s35 = scalar_select %p34, 0, %s33
      %s36 = sadd.s32 1, %s27
      %s37 = scalar_select %p34, %s36, %s27
      %p38 = scmp.ge.s32.totalorder %s37, 2
      %s39 = scalar_select %p38, 0, %s37
      %s40 = ssub.s32 %s27, %s39
      %p41 = scmp.eq.s32.totalorder %s40, 0
      %s43 = sadd.s32 %s42, 1
      %s44 = scalar_select %p41, %s42, %s43
      %p47 = pneg %p41
      %p48 = scmp.eq.s32.totalorder %s20, 1
      %p49 = por %p47, %p48
      %p50 = scmp.ne.s32.totalorder %s42, %s45
      %p51 = scmp.eq.s32.totalorder %s20, 0
      %p52 = por %p50, %p51
      %p53 = scmp.ne.s32.totalorder %s42, %s45
      %p54 = scmp.eq.s32.totalorder %s25, 1
      %p55 = por %p53, %p54
      %p56 = scmp.ne.s32.totalorder %s45, %s46
      %p57 = scmp.eq.s32.totalorder %s25, 0
      %p58 = por %p56, %p57
      %p59 = scmp.ne.s32.totalorder %s45, %s46
      %p60 = scmp.eq.s32.totalorder %s26, 1
      %p61 = por %p59, %p60
      %p63 = scmp.ne.s32.totalorder %s46, %s62
      %p64 = scmp.eq.s32.totalorder %s26, 0
      %p65 = por %p63, %p64
      %s66 = ssub.s32 %s28, %s35
      %p67 = scmp.eq.s32.totalorder %s66, 0
      %s69 = sadd.s32 %s68, 1
      %s70 = scalar_select %p67, %s68, %s69
      %p73 = pneg %p67
      %p74 = scmp.eq.s32.totalorder %s20, 1
      %p75 = por %p73, %p74
      %p76 = scmp.ne.s32.totalorder %s68, %s71
      %p77 = scmp.eq.s32.totalorder %s20, 0
      %p78 = por %p76, %p77
      %p79 = scmp.ne.s32.totalorder %s68, %s71
      %p80 = scmp.eq.s32.totalorder %s25, 1
      %p81 = por %p79, %p80
      %p82 = scmp.ne.s32.totalorder %s71, %s72
      %p83 = scmp.eq.s32.totalorder %s25, 0
      %p84 = por %p82, %p83
      %p85 = scmp.ne.s32.totalorder %s71, %s72
      %p86 = scmp.eq.s32.totalorder %s26, 1
      %p87 = por %p85, %p86
      %p89 = scmp.ne.s32.totalorder %s72, %s88
      %p90 = scmp.eq.s32.totalorder %s26, 0
      %p91 = por %p89, %p90
      %s92 = ssub.s32 %s28, %s35
      %p93 = scmp.eq.s32.totalorder %s92, 0
      %s95 = sadd.s32 %s94, 1
      %s96 = scalar_select %p93, %s94, %s95
      %p99 = pneg %p93
      %p100 = scmp.eq.s32.totalorder %s20, 1
      %p101 = por %p99, %p100
      %p102 = scmp.ne.s32.totalorder %s94, %s97
      %p103 = scmp.eq.s32.totalorder %s20, 0
      %p104 = por %p102, %p103
      %p105 = scmp.ne.s32.totalorder %s94, %s97
      %p106 = scmp.eq.s32.totalorder %s25, 1
      %p107 = por %p105, %p106
      %p108 = scmp.ne.s32.totalorder %s97, %s98
      %p109 = scmp.eq.s32.totalorder %s25, 0
      %p110 = por %p108, %p109
      %p111 = scmp.ne.s32.totalorder %s97, %s98
      %p112 = scmp.eq.s32.totalorder %s26, 1
      %p113 = por %p111, %p112
      %p115 = scmp.ne.s32.totalorder %s98, %s114
      %p116 = scmp.eq.s32.totalorder %s26, 0
      %p117 = por %p115, %p116
      %s118 = ssub.s32 %s28, %s35
      %p119 = scmp.eq.s32.totalorder %s118, 0
      %s121 = sadd.s32 %s120, 1
      %s122 = scalar_select %p119, %s120, %s121
      %p125 = pneg %p119
      %p126 = scmp.eq.s32.totalorder %s20, 1
      %p127 = por %p125, %p126
      %p128 = scmp.ne.s32.totalorder %s120, %s123
      %p129 = scmp.eq.s32.totalorder %s20, 0
      %p130 = por %p128, %p129
      %p131 = scmp.ne.s32.totalorder %s120, %s123
      %p132 = scmp.eq.s32.totalorder %s25, 1
      %p133 = por %p131, %p132
      %p134 = scmp.ne.s32.totalorder %s123, %s124
      %p135 = scmp.eq.s32.totalorder %s25, 0
      %p136 = por %p134, %p135
      %p137 = scmp.ne.s32.totalorder %s123, %s124
      %p138 = scmp.eq.s32.totalorder %s26, 1
      %p139 = por %p137, %p138
      %p141 = scmp.ne.s32.totalorder %s124, %s140
      %p142 = scmp.eq.s32.totalorder %s26, 0
      %p143 = por %p141, %p142
      %s145 = sadd.s32 %s144, 1
      %p148 = scmp.eq.s32.totalorder %s20, 1
      %p149 = scmp.ne.s32.totalorder %s144, %s146
      %p150 = scmp.eq.s32.totalorder %s20, 0
      %p151 = por %p149, %p150
      %p152 = scmp.ne.s32.totalorder %s144, %s146
      %p153 = scmp.eq.s32.totalorder %s25, 1
      %p154 = por %p152, %p153
      %p155 = scmp.ne.s32.totalorder %s146, %s147
      %p156 = scmp.eq.s32.totalorder %s25, 0
      %p157 = por %p155, %p156
      %p158 = scmp.ne.s32.totalorder %s146, %s147
      %p159 = scmp.eq.s32.totalorder %s26, 1
      %p160 = por %p158, %p159
      %p162 = scmp.ne.s32.totalorder %s147, %s161
      %p163 = scmp.eq.s32.totalorder %s26, 0
      %p164 = por %p162, %p163
      %s166 = sadd.s32 %s165, 1
      %p169 = scmp.eq.s32.totalorder %s20, 1
      %p170 = scmp.ne.s32.totalorder %s165, %s167
      %p171 = scmp.eq.s32.totalorder %s20, 0
      %p172 = por %p170, %p171
      %p173 = scmp.ne.s32.totalorder %s165, %s167
      %p174 = scmp.eq.s32.totalorder %s25, 1
      %p175 = por %p173, %p174
      %p176 = scmp.ne.s32.totalorder %s167, %s168
      %p177 = scmp.eq.s32.totalorder %s25, 0
      %p178 = por %p176, %p177
      %p179 = scmp.ne.s32.totalorder %s167, %s168
      %p180 = scmp.eq.s32.totalorder %s26, 1
      %p181 = por %p179, %p180
      %p183 = scmp.ne.s32.totalorder %s168, %s182
      %p184 = scmp.eq.s32.totalorder %s26, 0
      %p185 = por %p183, %p184
      %s187 = sadd.s32 %s186, 1
      %p190 = scmp.eq.s32.totalorder %s20, 1
      %p191 = scmp.ne.s32.totalorder %s186, %s188
      %p192 = scmp.eq.s32.totalorder %s20, 0
      %p193 = por %p191, %p192
      %p194 = scmp.ne.s32.totalorder %s186, %s188
      %p195 = scmp.eq.s32.totalorder %s25, 1
      %p196 = por %p194, %p195
      %p197 = scmp.ne.s32.totalorder %s188, %s189
      %p198 = scmp.eq.s32.totalorder %s25, 0
      %p199 = por %p197, %p198
      %p200 = scmp.ne.s32.totalorder %s188, %s189
      %p201 = scmp.eq.s32.totalorder %s26, 1
      %p202 = por %p200, %p201
      %p204 = scmp.ne.s32.totalorder %s189, %s203
      %p205 = scmp.eq.s32.totalorder %s26, 0
      %p206 = por %p204, %p205
      %s207 = ssub.s32 %s27, %s39
      %p208 = scmp.eq.s32.totalorder %s207, 0
      %s210 = sadd.s32 %s209, 1
      %s211 = scalar_select %p208, %s209, %s210
      %p214 = pneg %p208
      %p215 = scmp.eq.s32.totalorder %s20, 1
      %p216 = por %p214, %p215
      %p217 = scmp.ne.s32.totalorder %s209, %s212
      %p218 = scmp.eq.s32.totalorder %s20, 0
      %p219 = por %p217, %p218
      %p220 = scmp.ne.s32.totalorder %s209, %s212
      %p221 = scmp.eq.s32.totalorder %s25, 1
      %p222 = por %p220, %p221
      %p223 = scmp.ne.s32.totalorder %s212, %s213
      %p224 = scmp.eq.s32.totalorder %s25, 0
      %p225 = por %p223, %p224
      %p226 = scmp.ne.s32.totalorder %s212, %s213
      %p227 = scmp.eq.s32.totalorder %s26, 1
      %p228 = por %p226, %p227
      %p230 = scmp.ne.s32.totalorder %s213, %s229
      %p231 = scmp.eq.s32.totalorder %s26, 0
      %p232 = por %p230, %p231
      %p233 = scmp.le.s32.totalorder 1, %s20
      %p234 = scmp.lt.s32.totalorder %s20, 3
      %p235 = pnand %p233, %p234
      %p236 = pneg %p235
      // Predicated region
      $region9: #{tpu_custom_call.1} parent=5 // pred_check
        _
      $region10: #{tpu_custom_call.1} parent=5 // pred_check_branch
        %238 = sbr.rel (%p235) target = $region12
      $region11: #{tpu_custom_call.1} parent=5 // pred_region
        %s239 = ssub.s32 %s20, 1
        // Predicated region
        $region13: #{tpu_custom_call.1} parent=11 // pred_check
          %p240 = pneg %p84
        $region14: #{tpu_custom_call.1} parent=11 // pred_check_branch
          %242 = sbr.rel (%p240) target = $region16
        $region15: #{tpu_custom_call.1} parent=11 // pred_region
          %s243 = smul.u32 2, %s30
          %s245 = ssub.s32 4096, 4096
          %246 = vsyncadd [#allocation7], %s245
          %s247 = smul.addr %s243, 128
          %s248 = scalar_lea.hbm %s1, %s247
          %s249 = sshll.u32 [#allocation6], 4
          %s250 = int_to_ptr.vmem [resolvable:$true] %s249
          %255 = dma.hbm_to_vmem [thread:$0]  %s248, 4096, %s250, [#allocation7], 256, 256, 16
        $region16: #{tpu_custom_call.1} parent=11 // pred_fallthru
          _
        // Predicated region
        $region17: #{tpu_custom_call.1} parent=11 // pred_check
          %p256 = pneg %p110
        $region18: #{tpu_custom_call.1} parent=11 // pred_check_branch
          %258 = sbr.rel (%p256) target = $region20
        $region19: #{tpu_custom_call.1} parent=11 // pred_region
          %s259 = smul.u32 2, %s30
          %p260 = scmp.lt.s32.totalorder %s259, 1
          %s261 = scalar_select %p260, %s259, 1
          %s262 = scalar_lea.vmem %s2, %s261
          %s263 = smul.u32 2, %s30
        $region20: #{tpu_custom_call.1} parent=11 // pred_fallthru
          _
        // Predicated region
        $region21: #{tpu_custom_call.1} parent=11 // pred_check
          %p264 = pneg %p136
        $region22: #{tpu_custom_call.1} parent=11 // pred_check_branch
          %266 = sbr.rel (%p264) target = $region24
        $region23: #{tpu_custom_call.1} parent=11 // pred_region
          %s267 = smul.u32 32, %s30
          %s269 = ssub.s32 4096, 4096
          %270 = vsyncadd [#allocation7], %s269
          %s271 = smul.addr %s267, 128
          %s272 = scalar_lea.hbm %s3, %s271
          %s273 = sshll.u32 [#allocation8], 4
          %s274 = int_to_ptr.vmem [resolvable:$true] %s273
          %279 = dma.hbm_to_vmem [thread:$0]  %s272, 4096, %s274, [#allocation7], 128, 128, 8
        $region24: #{tpu_custom_call.1} parent=11 // pred_fallthru
          _
        // Predicated region
        $region25: #{tpu_custom_call.1} parent=11 // pred_check
          %p280 = pneg %p157
        $region26: #{tpu_custom_call.1} parent=11 // pred_check_branch
          %282 = sbr.rel (%p280) target = $region28
        $region27: #{tpu_custom_call.1} parent=11 // pred_region
          _
        $region28: #{tpu_custom_call.1} parent=11 // pred_fallthru
          _
        // Predicated region
        $region29: #{tpu_custom_call.1} parent=11 // pred_check
          %p283 = pneg %p178
        $region30: #{tpu_custom_call.1} parent=11 // pred_check_branch
          %285 = sbr.rel (%p283) target = $region32
        $region31: #{tpu_custom_call.1} parent=11 // pred_region
          _
        $region32: #{tpu_custom_call.1} parent=11 // pred_fallthru
          _
        // Predicated region
        $region33: #{tpu_custom_call.1} parent=11 // pred_check
          %p286 = pneg %p199
        $region34: #{tpu_custom_call.1} parent=11 // pred_check_branch
          %288 = sbr.rel (%p286) target = $region36
        $region35: #{tpu_custom_call.1} parent=11 // pred_region
          _
        $region36: #{tpu_custom_call.1} parent=11 // pred_fallthru
          _
      $region12: #{tpu_custom_call.1} parent=5 // pred_fallthru
        _
      %p289 = scmp.lt.s32.totalorder %s20, 2
      // Predicated region
      $region37: #{tpu_custom_call.1} parent=5 // pred_check
        %p290 = pneg %p289
      $region38: #{tpu_custom_call.1} parent=5 // pred_check_branch
        %292 = sbr.rel (%p290) target = $region40
      $region39: #{tpu_custom_call.1} parent=5 // pred_region
        // Predicated region
        $region41: #{tpu_custom_call.1} parent=39 // pred_check
          %p293 = pneg %p52
        $region42: #{tpu_custom_call.1} parent=39 // pred_check_branch
          %295 = sbr.rel (%p293) target = $region44
        $region43: #{tpu_custom_call.1} parent=39 // pred_region
          %s296 = sand.u32 %s42, 1
          %s297 = scalar_lea.sflag [#allocation4], %s296
          %s298 = sand.u32 %s42, 1
          %s299 = smul.addr %s298, 64
          %s300 = scalar_lea.vmem [#allocation3], %s299
          %s301 = smul.u32 8, %s27
          %s303 = ssub.s32 1024, 1024
          %304 = vsyncadd %s297, %s303
          %s305 = smul.addr %s301, 128
          %s306 = scalar_lea.hbm %s0, %s305
          %s307 = sshll.u32 %s300, 4
          %s308 = int_to_ptr.vmem [resolvable:$true] %s307
          %313 = dma.hbm_to_vmem [thread:$0]  %s306, 1024, %s308, %s297, 128, 128, 8
        $region44: #{tpu_custom_call.1} parent=39 // pred_fallthru
          _
      $region40: #{tpu_custom_call.1} parent=5 // pred_fallthru
        _
      %p314 = scmp.le.s32.totalorder 1, %s20
      %p315 = scmp.lt.s32.totalorder %s20, 3
      %p316 = pnand %p314, %p315
      %p317 = pneg %p316
      // Predicated region
      $region45: #{tpu_custom_call.1} parent=5 // pred_check
        _
      $region46: #{tpu_custom_call.1} parent=5 // pred_check_branch
        %319 = sbr.rel (%p316) target = $region48
      $region47: #{tpu_custom_call.1} parent=5 // pred_region
        %s320 = ssub.s32 %s20, 1
        %s321 = sand.u32 %s45, 1
        %s322 = scalar_lea.sflag [#allocation4], %s321
        %s323 = sand.u32 %s45, 1
        %s324 = smul.addr %s323, 64
        %s325 = scalar_lea.vmem [#allocation3], %s324
        // Predicated region
        $region49: #{tpu_custom_call.1} parent=47 // pred_check
          %p326 = pneg %p58
        $region50: #{tpu_custom_call.1} parent=47 // pred_check_branch
          %328 = sbr.rel (%p326) target = $region52
        $region51: #{tpu_custom_call.1} parent=47 // pred_region
          %329 = dma.done %s322, 1024
        $region52: #{tpu_custom_call.1} parent=47 // pred_fallthru
          _
        // Predicated region
        $region53: #{tpu_custom_call.1} parent=47 // pred_check
          %p330 = pneg %p84
        $region54: #{tpu_custom_call.1} parent=47 // pred_check_branch
          %332 = sbr.rel (%p330) target = $region56
        $region55: #{tpu_custom_call.1} parent=47 // pred_region
          %333 = dma.done [#allocation7], 4096
        $region56: #{tpu_custom_call.1} parent=47 // pred_fallthru
          _
        // Predicated region
        $region57: #{tpu_custom_call.1} parent=47 // pred_check
          %p334 = pneg %p136
        $region58: #{tpu_custom_call.1} parent=47 // pred_check_branch
          %336 = sbr.rel (%p334) target = $region60
        $region59: #{tpu_custom_call.1} parent=47 // pred_region
          %337 = dma.done [#allocation7], 4096
        $region60: #{tpu_custom_call.1} parent=47 // pred_fallthru
          _
        %s338 = sand.u32 %s45, 1
        %s339 = scalar_lea.sflag [#allocation4], %s338
        %s340 = sand.u32 %s45, 1
        %s341 = smul.addr %s340, 64
        %s342 = scalar_lea.vmem [#allocation3], %s341
        %p343 = pneg %p58
        %p344 = pneg %p55
        %p345 = pneg %p84
        %p346 = pneg %p81
        %s347 = smul.u32 2, %s30
        %p348 = scmp.lt.s32.totalorder %s347, 1
        %s349 = scalar_select %p348, %s347, 1
        %s350 = scalar_lea.vmem %s2, %s349
        %p351 = pneg %p110
        %p352 = pneg %p107
        %p353 = pneg %p136
        %p354 = pneg %p133
        %p355 = pneg %p157
        %p356 = pneg %p154
        %p357 = pneg %p178
        %p358 = pneg %p175
        %p359 = pneg %p199
        %p360 = pneg %p196
        %p361 = pneg %p225
        %p362 = pneg %p222
        %s363 = sand.u32 %s212, 1
        %s364 = scalar_lea.sflag [#allocation5], %s363
        %s365 = sand.u32 %s212, 1
        %s366 = smul.addr %s365, 64
        %s367 = scalar_lea.vmem [#allocation9], %s366
        %s368 = smul.u32 8, %s29
        %s369 = smul.u32 2, %s30
        %s370 = smul.u32 2, %s30
        %p371 = scmp.lt.s32.totalorder %s370, 1
        %s372 = scalar_select %p371, %s370, 1
        %s373 = scalar_lea.vmem %s2, %s372
        %s374 = smul.u32 2, %s30
        %s375 = smul.u32 32, %s30
        %s376 = smul.u32 8, %s29
        %v377 = vld [vmem:[%s325] sm:$0xff]
        %v378 = vld [vmem:[%s325 + $0x8] sm:$0xff]
        %v379 = vld [vmem:[%s325 + $0x10] sm:$0xff]
        %v380 = vld [vmem:[%s325 + $0x18] sm:$0xff]
        %v381 = vld [vmem:[%s325 + $0x20] sm:$0xff]
        %v382 = vld [vmem:[%s325 + $0x28] sm:$0xff]
        %v383 = vld [vmem:[%s325 + $0x30] sm:$0xff]
        %v384 = vld [vmem:[%s325 + $0x38] sm:$0xff]
        %v385 = vld [vmem:[#allocation6] sm:$0xff]
        %v386 = vld [vmem:[#allocation6 + $0x8] sm:$0xff]
        %v387 = vld [vmem:[#allocation6 + $0x10] sm:$0xff]
        %v388 = vld [vmem:[#allocation6 + $0x18] sm:$0xff]
        %v389 = vld [vmem:[#allocation6 + $0x20] sm:$0xff]
        %v390 = vld [vmem:[#allocation6 + $0x28] sm:$0xff]
        %v391 = vld [vmem:[#allocation6 + $0x30] sm:$0xff]
        %v392 = vld [vmem:[#allocation6 + $0x38] sm:$0xff]
        %v393 = vld [vmem:[#allocation6 + $0x40] sm:$0xff]
        %v394 = vld [vmem:[#allocation6 + $0x48] sm:$0xff]
        %v395 = vld [vmem:[#allocation6 + $0x50] sm:$0xff]
        %v396 = vld [vmem:[#allocation6 + $0x58] sm:$0xff]
        %v397 = vld [vmem:[#allocation6 + $0x60] sm:$0xff]
        %v398 = vld [vmem:[#allocation6 + $0x68] sm:$0xff]
        %v399 = vld [vmem:[#allocation6 + $0x70] sm:$0xff]
        %v400 = vld [vmem:[#allocation6 + $0x78] sm:$0xff]
        %v401 = vld [vmem:[#allocation6 + $0x80] sm:$0xff]
        %v402 = vld [vmem:[#allocation6 + $0x88] sm:$0xff]
        %v403 = vld [vmem:[#allocation6 + $0x90] sm:$0xff]
        %v404 = vld [vmem:[#allocation6 + $0x98] sm:$0xff]
        %v405 = vld [vmem:[#allocation6 + $0xa0] sm:$0xff]
        %v406 = vld [vmem:[#allocation6 + $0xa8] sm:$0xff]
        %v407 = vld [vmem:[#allocation6 + $0xb0] sm:$0xff]
        %v408 = vld [vmem:[#allocation6 + $0xb8] sm:$0xff]
        %v409 = vld [vmem:[#allocation6 + $0xc0] sm:$0xff]
        %v410 = vld [vmem:[#allocation6 + $0xc8] sm:$0xff]
        %v411 = vld [vmem:[#allocation6 + $0xd0] sm:$0xff]
        %v412 = vld [vmem:[#allocation6 + $0xd8] sm:$0xff]
        %v413 = vld [vmem:[#allocation6 + $0xe0] sm:$0xff]
        %v414 = vld [vmem:[#allocation6 + $0xe8] sm:$0xff]
        %v415 = vld [vmem:[#allocation6 + $0xf0] sm:$0xff]
        %v416 = vld [vmem:[#allocation6 + $0xf8] sm:$0xff]
        %v417 = vld [vmem:[%s373] sm:$0x3]
        %v419 = vlaneseq
        %v420 = vshrl.u32 %v419, 7
        %v421 = vsub.s32 0, %v420
        %v422 = vrot.slane %v417, %v421
        %v423 = vlaneseq
        %v424 = vshrl.u32 %v423, 7
        %v425 = vsub.s32 1, %v424
        %v426 = vrot.slane %v417, %v425
        %429 = vmatprep.subr.mxu0 %v416
        %430 = vmatpush1.msra.mxu0 %v415
        %431 = vmatprep.subr.mxu0 %v414
        %432 = vmatpush1.msra.mxu0 %v413
        %433 = vmatprep.subr.mxu0 %v412
        %434 = vmatpush1.msra.mxu0 %v411
        %435 = vmatprep.subr.mxu0 %v410
        %436 = vmatpush1.msra.mxu0 %v409
        %437 = vmatprep.subr.mxu0 %v408
        %438 = vmatpush1.msra.mxu0 %v407
        %439 = vmatprep.subr.mxu0 %v406
        %440 = vmatpush1.msra.mxu0 %v405
        %441 = vmatprep.subr.mxu0 %v404
        %442 = vmatpush1.msra.mxu0 %v403
        %443 = vmatprep.subr.mxu0 %v402
        %444 = vmatpush1.msra.mxu0 %v401
        %445 = vmatprep.subr.mxu0 %v400
        %446 = vmatpush1.msra.mxu0 %v399
        %447 = vmatprep.subr.mxu0 %v398
        %448 = vmatpush1.msra.mxu0 %v397
        %449 = vmatprep.subr.mxu0 %v396
        %450 = vmatpush1.msra.mxu0 %v395
        %451 = vmatprep.subr.mxu0 %v394
        %452 = vmatpush1.msra.mxu0 %v393
        %453 = vmatprep.subr.mxu0 %v392
        %454 = vmatpush1.msra.mxu0 %v391
        %455 = vmatprep.subr.mxu0 %v390
        %456 = vmatpush1.msra.mxu0 %v389
        %457 = vmatprep.subr.mxu0 %v388
        %458 = vmatpush1.msra.mxu0 %v387
        %459 = vmatprep.subr.mxu0 %v386
        %460 = vmatpush1.msra.mxu0 %v385
        %461 = vmatprep.subr.mxu0 0.0
        %462 = vmatpush2.msra.mxu0 0.0
        %463 = vmatprep.subr.mxu0 0.0
        %464 = vmatpush2.msra.mxu0 0.0
        %465 = vmatprep.subr.mxu0 0.0
        %466 = vmatpush2.msra.mxu0 0.0
        %467 = vmatprep.subr.mxu0 0.0
        %468 = vmatpush2.msra.mxu0 0.0
        %469 = vmatprep.subr.mxu0 0.0
        %470 = vmatpush2.msra.mxu0 0.0
        %471 = vmatprep.subr.mxu0 0.0
        %472 = vmatpush2.msra.mxu0 0.0
        %473 = vmatprep.subr.mxu0 0.0
        %474 = vmatpush2.msra.mxu0 0.0
        %475 = vmatprep.subr.mxu0 0.0
        %476 = vmatpush2.msra.mxu0 0.0
        %477 = vmatprep.subr.mxu0 0.0
        %478 = vmatpush2.msra.mxu0 0.0
        %479 = vmatprep.subr.mxu0 0.0
        %480 = vmatpush2.msra.mxu0 0.0
        %481 = vmatprep.subr.mxu0 0.0
        %482 = vmatpush2.msra.mxu0 0.0
        %483 = vmatprep.subr.mxu0 0.0
        %484 = vmatpush2.msra.mxu0 0.0
        %485 = vmatprep.subr.mxu0 0.0
        %486 = vmatpush2.msra.mxu0 0.0
        %487 = vmatprep.subr.mxu0 0.0
        %488 = vmatpush2.msra.mxu0 0.0
        %489 = vmatprep.subr.mxu0 0.0
        %490 = vmatpush2.msra.mxu0 0.0
        %491 = vmatprep.subr.mxu0 0.0
        %492 = vmatpush2.msra.mxu0 0.0
        %493 = vmatprep.mubr.f32.mxu0 0.0
        %494 = vmatmul.mubr.f32.gmra.mxu0 %v377
        %v495 = vpop.f32.mrf.mxu0
        %v496 = vadd.f32 %v422, %v495
        %v497 = vpop.f32.mrf.mxu0
        %v498 = vadd.f32 %v426, %v497
        %499 = vmatprep.mubr.f32.mxu0 0.0
        %500 = vmatmul.mubr.f32.gmra.mxu0 %v378
        %v501 = vpop.f32.mrf.mxu0
        %v502 = vadd.f32 %v422, %v501
        %v503 = vpop.f32.mrf.mxu0
        %v504 = vadd.f32 %v426, %v503
        %505 = vmatprep.mubr.f32.mxu0 0.0
        %506 = vmatmul.mubr.f32.gmra.mxu0 %v379
        %v507 = vpop.f32.mrf.mxu0
        %v508 = vadd.f32 %v422, %v507
        %v509 = vpop.f32.mrf.mxu0
        %v510 = vadd.f32 %v426, %v509
        %511 = vmatprep.mubr.f32.mxu0 0.0
        %512 = vmatmul.mubr.f32.gmra.mxu0 %v380
        %v513 = vpop.f32.mrf.mxu0
        %v514 = vadd.f32 %v422, %v513
        %v515 = vpop.f32.mrf.mxu0
        %v516 = vadd.f32 %v426, %v515
        %517 = vmatprep.mubr.f32.mxu0 0.0
        %518 = vmatmul.mubr.f32.gmra.mxu0 %v381
        %v519 = vpop.f32.mrf.mxu0
        %v520 = vadd.f32 %v422, %v519
        %v521 = vpop.f32.mrf.mxu0
        %v522 = vadd.f32 %v426, %v521
        %523 = vmatprep.mubr.f32.mxu0 0.0
        %524 = vmatmul.mubr.f32.gmra.mxu0 %v382
        %v525 = vpop.f32.mrf.mxu0
        %v526 = vadd.f32 %v422, %v525
        %v527 = vpop.f32.mrf.mxu0
        %v528 = vadd.f32 %v426, %v527
        %529 = vmatprep.mubr.f32.mxu0 0.0
        %530 = vmatmul.mubr.f32.gmra.mxu0 %v383
        %v531 = vpop.f32.mrf.mxu0
        %v532 = vadd.f32 %v422, %v531
        %v533 = vpop.f32.mrf.mxu0
        %v534 = vadd.f32 %v426, %v533
        %535 = vmatprep.mubr.f32.mxu0 0.0
        %536 = vmatmul.mubr.f32.gmra.mxu0 %v384
        %v537 = vpop.f32.mrf.mxu0
        %v538 = vadd.f32 %v422, %v537
        %v539 = vpop.f32.mrf.mxu0
        %v540 = vadd.f32 %v426, %v539
        %541 = vdwg.mxu0
        %v542 = vmax.f32 %v496, 0.0
        %v543 = vmax.f32 %v498, 0.0
        %v544 = vmax.f32 %v502, 0.0
        %v545 = vmax.f32 %v504, 0.0
        %v546 = vmax.f32 %v508, 0.0
        %v547 = vmax.f32 %v510, 0.0
        %v548 = vmax.f32 %v514, 0.0
        %v549 = vmax.f32 %v516, 0.0
        %v550 = vmax.f32 %v520, 0.0
        %v551 = vmax.f32 %v522, 0.0
        %v552 = vmax.f32 %v526, 0.0
        %v553 = vmax.f32 %v528, 0.0
        %v554 = vmax.f32 %v532, 0.0
        %v555 = vmax.f32 %v534, 0.0
        %v556 = vmax.f32 %v538, 0.0
        %v557 = vmax.f32 %v540, 0.0
        %v558 = vld [vmem:[#allocation8] sm:$0xff]
        %v559 = vld [vmem:[#allocation8 + $0x8] sm:$0xff]
        %v560 = vld [vmem:[#allocation8 + $0x10] sm:$0xff]
        %v561 = vld [vmem:[#allocation8 + $0x18] sm:$0xff]
        %v562 = vld [vmem:[#allocation8 + $0x20] sm:$0xff]
        %v563 = vld [vmem:[#allocation8 + $0x28] sm:$0xff]
        %v564 = vld [vmem:[#allocation8 + $0x30] sm:$0xff]
        %v565 = vld [vmem:[#allocation8 + $0x38] sm:$0xff]
        %v566 = vld [vmem:[#allocation8 + $0x40] sm:$0xff]
        %v567 = vld [vmem:[#allocation8 + $0x48] sm:$0xff]
        %v568 = vld [vmem:[#allocation8 + $0x50] sm:$0xff]
        %v569 = vld [vmem:[#allocation8 + $0x58] sm:$0xff]
        %v570 = vld [vmem:[#allocation8 + $0x60] sm:$0xff]
        %v571 = vld [vmem:[#allocation8 + $0x68] sm:$0xff]
        %v572 = vld [vmem:[#allocation8 + $0x70] sm:$0xff]
        %v573 = vld [vmem:[#allocation8 + $0x78] sm:$0xff]
        %v574 = vld [vmem:[#allocation8 + $0x80] sm:$0xff]
        %v575 = vld [vmem:[#allocation8 + $0x88] sm:$0xff]
        %v576 = vld [vmem:[#allocation8 + $0x90] sm:$0xff]
        %v577 = vld [vmem:[#allocation8 + $0x98] sm:$0xff]
        %v578 = vld [vmem:[#allocation8 + $0xa0] sm:$0xff]
        %v579 = vld [vmem:[#allocation8 + $0xa8] sm:$0xff]
        %v580 = vld [vmem:[#allocation8 + $0xb0] sm:$0xff]
        %v581 = vld [vmem:[#allocation8 + $0xb8] sm:$0xff]
        %v582 = vld [vmem:[#allocation8 + $0xc0] sm:$0xff]
        %v583 = vld [vmem:[#allocation8 + $0xc8] sm:$0xff]
        %v584 = vld [vmem:[#allocation8 + $0xd0] sm:$0xff]
        %v585 = vld [vmem:[#allocation8 + $0xd8] sm:$0xff]
        %v586 = vld [vmem:[#allocation8 + $0xe0] sm:$0xff]
        %v587 = vld [vmem:[#allocation8 + $0xe8] sm:$0xff]
        %v588 = vld [vmem:[#allocation8 + $0xf0] sm:$0xff]
        %v589 = vld [vmem:[#allocation8 + $0xf8] sm:$0xff]
        %590 = vmatprep.subr.mxu0 0.0
        %591 = vmatpush1.msra.mxu0 %v573
        %592 = vmatprep.subr.mxu0 0.0
        %593 = vmatpush1.msra.mxu0 %v572
        %594 = vmatprep.subr.mxu0 0.0
        %595 = vmatpush1.msra.mxu0 %v571
        %596 = vmatprep.subr.mxu0 0.0
        %597 = vmatpush1.msra.mxu0 %v570
        %598 = vmatprep.subr.mxu0 0.0
        %599 = vmatpush1.msra.mxu0 %v569
        %600 = vmatprep.subr.mxu0 0.0
        %601 = vmatpush1.msra.mxu0 %v568
        %602 = vmatprep.subr.mxu0 0.0
        %603 = vmatpush1.msra.mxu0 %v567
        %604 = vmatprep.subr.mxu0 0.0
        %605 = vmatpush1.msra.mxu0 %v566
        %606 = vmatprep.subr.mxu0 0.0
        %607 = vmatpush1.msra.mxu0 %v565
        %608 = vmatprep.subr.mxu0 0.0
        %609 = vmatpush1.msra.mxu0 %v564
        %610 = vmatprep.subr.mxu0 0.0
        %611 = vmatpush1.msra.mxu0 %v563
        %612 = vmatprep.subr.mxu0 0.0
        %613 = vmatpush1.msra.mxu0 %v562
        %614 = vmatprep.subr.mxu0 0.0
        %615 = vmatpush1.msra.mxu0 %v561
        %616 = vmatprep.subr.mxu0 0.0
        %617 = vmatpush1.msra.mxu0 %v560
        %618 = vmatprep.subr.mxu0 0.0
        %619 = vmatpush1.msra.mxu0 %v559
        %620 = vmatprep.subr.mxu0 0.0
        %621 = vmatpush1.msra.mxu0 %v558
        %622 = vmatprep.subr.mxu0 0.0
        %623 = vmatpush2.msra.mxu0 %v589
        %624 = vmatprep.subr.mxu0 0.0
        %625 = vmatpush2.msra.mxu0 %v588
        %626 = vmatprep.subr.mxu0 0.0
        %627 = vmatpush2.msra.mxu0 %v587
        %628 = vmatprep.subr.mxu0 0.0
        %629 = vmatpush2.msra.mxu0 %v586
        %630 = vmatprep.subr.mxu0 0.0
        %631 = vmatpush2.msra.mxu0 %v585
        %632 = vmatprep.subr.mxu0 0.0
        %633 = vmatpush2.msra.mxu0 %v584
        %634 = vmatprep.subr.mxu0 0.0
        %635 = vmatpush2.msra.mxu0 %v583
        %636 = vmatprep.subr.mxu0 0.0
        %637 = vmatpush2.msra.mxu0 %v582
        %638 = vmatprep.subr.mxu0 0.0
        %639 = vmatpush2.msra.mxu0 %v581
        %640 = vmatprep.subr.mxu0 0.0
        %641 = vmatpush2.msra.mxu0 %v580
        %642 = vmatprep.subr.mxu0 0.0
        %643 = vmatpush2.msra.mxu0 %v579
        %644 = vmatprep.subr.mxu0 0.0
        %645 = vmatpush2.msra.mxu0 %v578
        %646 = vmatprep.subr.mxu0 0.0
        %647 = vmatpush2.msra.mxu0 %v577
        %648 = vmatprep.subr.mxu0 0.0
        %649 = vmatpush2.msra.mxu0 %v576
        %650 = vmatprep.subr.mxu0 0.0
        %651 = vmatpush2.msra.mxu0 %v575
        %652 = vmatprep.subr.mxu0 0.0
        %653 = vmatpush2.msra.mxu0 %v574
        %654 = vmatprep.mubr.f32.mxu0 %v543
        %655 = vmatmul.mubr.f32.gmra.mxu0 %v542
        %v656 = vpop.f32.mrf.mxu0
        %v657 = vadd.f32 0.0, %v656
        %v658 = vpop.f32.mrf.mxu0
        %659 = vmatprep.mubr.f32.mxu0 %v545
        %660 = vmatmul.mubr.f32.gmra.mxu0 %v544
        %v661 = vpop.f32.mrf.mxu0
        %v662 = vadd.f32 0.0, %v661
        %v663 = vpop.f32.mrf.mxu0
        %664 = vmatprep.mubr.f32.mxu0 %v547
        %665 = vmatmul.mubr.f32.gmra.mxu0 %v546
        %v666 = vpop.f32.mrf.mxu0
        %v667 = vadd.f32 0.0, %v666
        %v668 = vpop.f32.mrf.mxu0
        %669 = vmatprep.mubr.f32.mxu0 %v549
        %670 = vmatmul.mubr.f32.gmra.mxu0 %v548
        %v671 = vpop.f32.mrf.mxu0
        %v672 = vadd.f32 0.0, %v671
        %v673 = vpop.f32.mrf.mxu0
        %674 = vmatprep.mubr.f32.mxu0 %v551
        %675 = vmatmul.mubr.f32.gmra.mxu0 %v550
        %v676 = vpop.f32.mrf.mxu0
        %v677 = vadd.f32 0.0, %v676
        %v678 = vpop.f32.mrf.mxu0
        %679 = vmatprep.mubr.f32.mxu0 %v553
        %680 = vmatmul.mubr.f32.gmra.mxu0 %v552
        %v681 = vpop.f32.mrf.mxu0
        %v682 = vadd.f32 0.0, %v681
        %v683 = vpop.f32.mrf.mxu0
        %684 = vmatprep.mubr.f32.mxu0 %v555
        %685 = vmatmul.mubr.f32.gmra.mxu0 %v554
        %v686 = vpop.f32.mrf.mxu0
        %v687 = vadd.f32 0.0, %v686
        %v688 = vpop.f32.mrf.mxu0
        %689 = vmatprep.mubr.f32.mxu0 %v557
        %690 = vmatmul.mubr.f32.gmra.mxu0 %v556
        %v691 = vpop.f32.mrf.mxu0
        %v692 = vadd.f32 0.0, %v691
        %v693 = vpop.f32.mrf.mxu0
        %694 = vdwg.mxu0
        %p695 = scmp.eq.s32.totalorder %s30, 0
        // Predicated region
        $region61: #{tpu_custom_call.1} parent=47 // pred_check
          %p696 = pneg %p695
        $region62: #{tpu_custom_call.1} parent=47 // pred_check_branch
          %698 = sbr.rel (%p696) target = $region64
        $region63: #{tpu_custom_call.1} parent=47 // pred_region
          %699 = vst [vmem:[#allocation2] sm:$0xff] %v657
          %700 = vst [vmem:[#allocation2 + $0x8] sm:$0xff] %v662
          %701 = vst [vmem:[#allocation2 + $0x10] sm:$0xff] %v667
          %702 = vst [vmem:[#allocation2 + $0x18] sm:$0xff] %v672
          %703 = vst [vmem:[#allocation2 + $0x20] sm:$0xff] %v677
          %704 = vst [vmem:[#allocation2 + $0x28] sm:$0xff] %v682
          %705 = vst [vmem:[#allocation2 + $0x30] sm:$0xff] %v687
          %706 = vst [vmem:[#allocation2 + $0x38] sm:$0xff] %v692
        $region64: #{tpu_custom_call.1} parent=47 // pred_fallthru
          _
        %p707 = scmp.gt.s32.totalorder %s30, 0
        // Predicated region
        $region65: #{tpu_custom_call.1} parent=47 // pred_check
          %p708 = pneg %p707
        $region66: #{tpu_custom_call.1} parent=47 // pred_check_branch
          %710 = sbr.rel (%p708) target = $region68
        $region67: #{tpu_custom_call.1} parent=47 // pred_region
          %v711 = vld [vmem:[#allocation2] sm:$0xff]
          %v712 = vld [vmem:[#allocation2 + $0x8] sm:$0xff]
          %v713 = vld [vmem:[#allocation2 + $0x10] sm:$0xff]
          %v714 = vld [vmem:[#allocation2 + $0x18] sm:$0xff]
          %v715 = vld [vmem:[#allocation2 + $0x20] sm:$0xff]
          %v716 = vld [vmem:[#allocation2 + $0x28] sm:$0xff]
          %v717 = vld [vmem:[#allocation2 + $0x30] sm:$0xff]
          %v718 = vld [vmem:[#allocation2 + $0x38] sm:$0xff]
          %v719 = vadd.f32 %v711, %v657
          %v720 = vadd.f32 %v712, %v662
          %v721 = vadd.f32 %v713, %v667
          %v722 = vadd.f32 %v714, %v672
          %v723 = vadd.f32 %v715, %v677
          %v724 = vadd.f32 %v716, %v682
          %v725 = vadd.f32 %v717, %v687
          %v726 = vadd.f32 %v718, %v692
          %727 = vst [vmem:[#allocation2] sm:$0xff] %v719
          %728 = vst [vmem:[#allocation2 + $0x8] sm:$0xff] %v720
          %729 = vst [vmem:[#allocation2 + $0x10] sm:$0xff] %v721
          %730 = vst [vmem:[#allocation2 + $0x18] sm:$0xff] %v722
          %731 = vst [vmem:[#allocation2 + $0x20] sm:$0xff] %v723
          %732 = vst [vmem:[#allocation2 + $0x28] sm:$0xff] %v724
          %733 = vst [vmem:[#allocation2 + $0x30] sm:$0xff] %v725
          %734 = vst [vmem:[#allocation2 + $0x38] sm:$0xff] %v726
        $region68: #{tpu_custom_call.1} parent=47 // pred_fallthru
          _
        // Predicated region
        $region69: #{tpu_custom_call.1} parent=47 // pred_check
          %p735 = pneg %p695
        $region70: #{tpu_custom_call.1} parent=47 // pred_check_branch
          %737 = sbr.rel (%p735) target = $region72
        $region71: #{tpu_custom_call.1} parent=47 // pred_region
          %v738 = vld [vmem:[#allocation2] sm:$0xff]
          %v739 = vld [vmem:[#allocation2 + $0x8] sm:$0xff]
          %v740 = vld [vmem:[#allocation2 + $0x10] sm:$0xff]
          %v741 = vld [vmem:[#allocation2 + $0x18] sm:$0xff]
          %v742 = vld [vmem:[#allocation2 + $0x20] sm:$0xff]
          %v743 = vld [vmem:[#allocation2 + $0x28] sm:$0xff]
          %v744 = vld [vmem:[#allocation2 + $0x30] sm:$0xff]
          %v745 = vld [vmem:[#allocation2 + $0x38] sm:$0xff]
          %v746 = vld [vmem:[%s4] sm:$0x1]
          %v748 = vlaneseq
          %v749 = vshrl.u32 %v748, 7
          %v750 = vsub.s32 0, %v749
          %v751 = vrot.slane %v746, %v750
          %v753 = vadd.f32 %v738, %v751
          %v754 = vadd.f32 %v739, %v751
          %v755 = vadd.f32 %v740, %v751
          %v756 = vadd.f32 %v741, %v751
          %v757 = vadd.f32 %v742, %v751
          %v758 = vadd.f32 %v743, %v751
          %v759 = vadd.f32 %v744, %v751
          %v760 = vadd.f32 %v745, %v751
          %v761 = vadd.f32 %v753, %v377
          %v762 = vadd.f32 %v754, %v378
          %v763 = vadd.f32 %v755, %v379
          %v764 = vadd.f32 %v756, %v380
          %v765 = vadd.f32 %v757, %v381
          %v766 = vadd.f32 %v758, %v382
          %v767 = vadd.f32 %v759, %v383
          %v768 = vadd.f32 %v760, %v384
          %769 = vadd.xlane.f32.xlu0 %v761
          %v770 = vpop.xlane.xlu0 %769
          %771 = vadd.xlane.f32.xlu0 %v762
          %v772 = vpop.xlane.xlu0 %771
          %773 = vadd.xlane.f32.xlu0 %v763
          %v774 = vpop.xlane.xlu0 %773
          %775 = vadd.xlane.f32.xlu0 %v764
          %v776 = vpop.xlane.xlu0 %775
          %777 = vadd.xlane.f32.xlu0 %v765
          %v778 = vpop.xlane.xlu0 %777
          %779 = vadd.xlane.f32.xlu0 %v766
          %v780 = vpop.xlane.xlu0 %779
          %781 = vadd.xlane.f32.xlu0 %v767
          %v782 = vpop.xlane.xlu0 %781
          %783 = vadd.xlane.f32.xlu0 %v768
          %v784 = vpop.xlane.xlu0 %783
          %v785 = vrcp.pop 128.0
          %v786 = vmul.f32 %v770, %v785
          %v787 = vmul.f32 %v772, %v785
          %v788 = vmul.f32 %v774, %v785
          %v789 = vmul.f32 %v776, %v785
          %v790 = vmul.f32 %v778, %v785
          %v791 = vmul.f32 %v780, %v785
          %v792 = vmul.f32 %v782, %v785
          %v793 = vmul.f32 %v784, %v785
          %v794 = vsub.f32 %v761, %v786
          %v795 = vsub.f32 %v762, %v787
          %v796 = vsub.f32 %v763, %v788
          %v797 = vsub.f32 %v764, %v789
          %v798 = vsub.f32 %v765, %v790
          %v799 = vsub.f32 %v766, %v791
          %v800 = vsub.f32 %v767, %v792
          %v801 = vsub.f32 %v768, %v793
          %v802 = vmul.f32 %v794, %v794
          %v803 = vmul.f32 %v795, %v795
          %v804 = vmul.f32 %v796, %v796
          %v805 = vmul.f32 %v797, %v797
          %v806 = vmul.f32 %v798, %v798
          %v807 = vmul.f32 %v799, %v799
          %v808 = vmul.f32 %v800, %v800
          %v809 = vmul.f32 %v801, %v801
          %810 = vadd.xlane.f32.xlu0 %v802
          %v811 = vpop.xlane.xlu0 %810
          %812 = vadd.xlane.f32.xlu0 %v803
          %v813 = vpop.xlane.xlu0 %812
          %814 = vadd.xlane.f32.xlu0 %v804
          %v815 = vpop.xlane.xlu0 %814
          %816 = vadd.xlane.f32.xlu0 %v805
          %v817 = vpop.xlane.xlu0 %816
          %818 = vadd.xlane.f32.xlu0 %v806
          %v819 = vpop.xlane.xlu0 %818
          %820 = vadd.xlane.f32.xlu0 %v807
          %v821 = vpop.xlane.xlu0 %820
          %822 = vadd.xlane.f32.xlu0 %v808
          %v823 = vpop.xlane.xlu0 %822
          %824 = vadd.xlane.f32.xlu0 %v809
          %v825 = vpop.xlane.xlu0 %824
          %v826 = vmul.f32 %v811, %v785
          %v827 = vmul.f32 %v813, %v785
          %v828 = vmul.f32 %v815, %v785
          %v829 = vmul.f32 %v817, %v785
          %v830 = vmul.f32 %v819, %v785
          %v831 = vmul.f32 %v821, %v785
          %v832 = vmul.f32 %v823, %v785
          %v833 = vmul.f32 %v825, %v785
          %v834 = vadd.f32 %v826, 1e-05
          %v835 = vadd.f32 %v827, 1e-05
          %v836 = vadd.f32 %v828, 1e-05
          %v837 = vadd.f32 %v829, 1e-05
          %v838 = vadd.f32 %v830, 1e-05
          %v839 = vadd.f32 %v831, 1e-05
          %v840 = vadd.f32 %v832, 1e-05
          %v841 = vadd.f32 %v833, 1e-05
          %v842 = vrsqrt.pop %v834
          %v843 = vrsqrt.pop %v835
          %v844 = vrsqrt.pop %v836
          %v845 = vrsqrt.pop %v837
          %v846 = vrsqrt.pop %v838
          %v847 = vrsqrt.pop %v839
          %v848 = vrsqrt.pop %v840
          %v849 = vrsqrt.pop %v841
          %v850 = vmul.f32 %v794, %v842
          %v851 = vmul.f32 %v795, %v843
          %v852 = vmul.f32 %v796, %v844
          %v853 = vmul.f32 %v797, %v845
          %v854 = vmul.f32 %v798, %v846
          %v855 = vmul.f32 %v799, %v847
          %v856 = vmul.f32 %v800, %v848
          %v857 = vmul.f32 %v801, %v849
          %v858 = vld [vmem:[%s5] sm:$0x1]
          %v860 = vlaneseq
          %v861 = vshrl.u32 %v860, 7
          %v862 = vsub.s32 0, %v861
          %v863 = vrot.slane %v858, %v862
          %v865 = vmul.f32 %v850, %v863
          %v866 = vmul.f32 %v851, %v863
          %v867 = vmul.f32 %v852, %v863
          %v868 = vmul.f32 %v853, %v863
          %v869 = vmul.f32 %v854, %v863
          %v870 = vmul.f32 %v855, %v863
          %v871 = vmul.f32 %v856, %v863
          %v872 = vmul.f32 %v857, %v863
          %v873 = vld [vmem:[%s6] sm:$0x1]
          %v875 = vlaneseq
          %v876 = vshrl.u32 %v875, 7
          %v877 = vsub.s32 0, %v876
          %v878 = vrot.slane %v873, %v877
          %v880 = vadd.f32 %v865, %v878
          %v881 = vadd.f32 %v866, %v878
          %v882 = vadd.f32 %v867, %v878
          %v883 = vadd.f32 %v868, %v878
          %v884 = vadd.f32 %v869, %v878
          %v885 = vadd.f32 %v870, %v878
          %v886 = vadd.f32 %v871, %v878
          %v887 = vadd.f32 %v872, %v878
          %888 = vst [vmem:[%s367] sm:$0xff] %v880
          %889 = vst [vmem:[%s367 + $0x8] sm:$0xff] %v881
          %890 = vst [vmem:[%s367 + $0x10] sm:$0xff] %v882
          %891 = vst [vmem:[%s367 + $0x18] sm:$0xff] %v883
          %892 = vst [vmem:[%s367 + $0x20] sm:$0xff] %v884
          %893 = vst [vmem:[%s367 + $0x28] sm:$0xff] %v885
          %894 = vst [vmem:[%s367 + $0x30] sm:$0xff] %v886
          %895 = vst [vmem:[%s367 + $0x38] sm:$0xff] %v887
        $region72: #{tpu_custom_call.1} parent=47 // pred_fallthru
          _
        %s896 = sand.u32 %s212, 1
        %s897 = scalar_lea.sflag [#allocation5], %s896
        %s898 = sand.u32 %s212, 1
        %s899 = smul.addr %s898, 64
        %s900 = scalar_lea.vmem [#allocation9], %s899
        // Predicated region
        $region73: #{tpu_custom_call.1} parent=47 // pred_check
          %p901 = pneg %p222
        $region74: #{tpu_custom_call.1} parent=47 // pred_check_branch
          %903 = sbr.rel (%p901) target = $region76
        $region75: #{tpu_custom_call.1} parent=47 // pred_region
          %s904 = smul.u32 8, %s29
          %s906 = ssub.s32 1024, 1024
          %907 = vsyncadd %s897, %s906
          %s908 = smul.addr %s904, 128
          %s909 = scalar_lea.hbm %s7, %s908
          %s910 = sshll.u32 %s900, 4
          %s911 = int_to_ptr.vmem [resolvable:$true] %s910
          %916 = dma.vmem_to_hbm [thread:$0]  %s911, 1024, %s909, %s897, 128, 128, 8
        $region76: #{tpu_custom_call.1} parent=47 // pred_fallthru
          _
      $region48: #{tpu_custom_call.1} parent=5 // pred_fallthru
        _
      %p917 = scmp.le.s32.totalorder 2, %s20
      // Predicated region
      $region77: #{tpu_custom_call.1} parent=5 // pred_check
        %p918 = pneg %p917
      $region78: #{tpu_custom_call.1} parent=5 // pred_check_branch
        %920 = sbr.rel (%p918) target = $region80
      $region79: #{tpu_custom_call.1} parent=5 // pred_region
        %s921 = ssub.s32 %s20, 2
        // Predicated region
        $region81: #{tpu_custom_call.1} parent=79 // pred_check
          %p922 = pneg %p228
        $region82: #{tpu_custom_call.1} parent=79 // pred_check_branch
          %924 = sbr.rel (%p922) target = $region84
        $region83: #{tpu_custom_call.1} parent=79 // pred_region
          %s925 = sand.u32 %s213, 1
          %s926 = scalar_lea.sflag [#allocation5], %s925
          %s927 = sand.u32 %s213, 1
          %s928 = smul.addr %s927, 64
          %s929 = scalar_lea.vmem [#allocation9], %s928
          %930 = dma.done %s926, 1024
        $region84: #{tpu_custom_call.1} parent=79 // pred_fallthru
          _
      $region80: #{tpu_custom_call.1} parent=5 // pred_fallthru
        _
    $region6: #{tpu_custom_call.1} parent=1 // loop_footer
      %s24 = sadd.s32 1, %s20
    $region7: #{tpu_custom_call.1} parent=1 // loop_footer_branch
      %19 = sbr.rel target = $region3
    $region8: #{tpu_custom_call.1} parent=1 // loop_exit
      _
    %931 = vsyncpa [#allocation4], 1
    %s932 = scalar_lea.sflag [#allocation4], 1
    %933 = vsyncpa %s932, 1
    %934 = vsyncpa [#allocation7], 1
    %935 = vsyncpa [#allocation5], 1
    %s936 = scalar_lea.sflag [#allocation5], 1
    %937 = vsyncpa %s936, 1

</llo_original>
